<compile_context>
chip_gen: v5e
topology: v5e:2x2
jax: 0.10.0
libtpu: 0.0.40
codegen_flags: <defaults>
</compile_context>

<pallas_src>
import math

import jax
import jax.numpy as jnp
from jax.experimental import pallas as pl
from jax.experimental.pallas import tpu as pltpu


def _tpu_generation():
    """Best-effort TPU generation detection (7 = v7x, 6 = v6e, 5 = v5e/older)."""
    try:
        kind = jax.devices()[0].device_kind.lower()
    except Exception:
        return 6
    for g in (7, 6, 5):
        if "v{}".format(g) in kind:
            return g
    return 6


def _gen_params(gen):
    if gen >= 7:
        # v7x: ~3.2 TB/s HBM per TC -> bigger blocks to hide the ~0.35us/step overhead;
        # 64 MiB physical VMEM -> 48 MiB limit; 2 TCs -> keep the 'parallel' row grid
        # axis at extent >= 2 whenever possible (fold_rows / row-tile split below).
        return dict(target_bytes=8 << 20, tile_d_cap=8192, vmem_limit=48 << 20,
                    fold_rows=512, min_dp=1024, split_rows_for_cores=True)
    if gen == 6:
        # v6e: ~1.4 TB/s HBM; 4 MiB blocks halve per-step overhead, 128 MiB physical VMEM.
        return dict(target_bytes=4 << 20, tile_d_cap=8192, vmem_limit=64 << 20,
                    fold_rows=128, min_dp=256, split_rows_for_cores=False)
    # v5e (and unknown): firmly HBM-bound (~0.8 TB/s); 2 MiB blocks already keep step
    # overhead <10%, leave VMEM as headroom. f32 math in-kernel (no bf16 VPU/EUP on v5e).
    return dict(target_bytes=2 << 20, tile_d_cap=4096, vmem_limit=40 << 20,
                fold_rows=128, min_dp=256, split_rows_for_cores=False)


def _make_bce_rowsum_kernel(tile_n, tile_d, d_valid, needs_mask):
    """Builds the kernel for a (tile_n, tile_d) block; closes over static sizes."""
    n_chunks = tile_d // 128  # tile_d is always a multiple of 128

    def chunk_loss(x_ref, y_ref, c):
        # Slice the Refs per 128-lane chunk (static, aligned offsets): live working set
        # stays at a few (tile_n,128) values instead of a (tile_n,tile_d) loss temp.
        x = x_ref[:, c * 128:(c + 1) * 128].astype(jnp.float32)
        y = y_ref[:, c * 128:(c + 1) * 128].astype(jnp.float32)
        # Numerically-stable BCE with logits (same as PyTorch):
        #   loss = max(x, 0) - x*y + log(1 + exp(-|x|))
        # TODO(synk): on v7x with bf16 inputs the two transcendentals saturate the single
        # EUP slot; a validated VPU polynomial for log1p(exp(-|x|)) could recover ~30%
        # there. Kept exact here for bit-faithful semantics.
        return jnp.maximum(x, 0.0) - x * y + jnp.log1p(jnp.exp(-jnp.abs(x)))

    def kernel(x_ref, y_ref, out_ref, acc_ref):
        dj = pl.program_id(1)
        last = pl.num_programs(1) - 1

        @pl.when(dj == 0)
        def _():
            acc_ref[...] = jnp.zeros_like(acc_ref)

        def accumulate_all():
            for c in range(n_chunks):
                acc_ref[...] += chunk_loss(x_ref, y_ref, c)

        if not needs_mask:
            accumulate_all()
        else:
            # Only the last D block overhangs the array; keep the mask (and skipped
            # out-of-bounds chunks) off the hot path for every other grid step.
            d_rem = d_valid % tile_d          # valid columns in the last block (>0)
            n_full = d_rem // 128             # fully-valid 128-lane chunks
            lane_rem = d_rem % 128            # valid lanes in the crossing chunk

            @pl.when(dj != last)
            def _():
                accumulate_all()

            @pl.when(dj == last)
            def _():
                for c in range(n_full):
                    acc_ref[...] += chunk_loss(x_ref, y_ref, c)
                if lane_rem:
                    # Overhang lanes hold undefined VMEM data (possibly NaN/Inf);
                    # jnp.where selects, so garbage never reaches the accumulator.
                    lane = jax.lax.broadcasted_iota(jnp.int32, (tile_n, 128), 1)
                    acc_ref[...] += jnp.where(
                        lane < lane_rem, chunk_loss(x_ref, y_ref, n_full), 0.0)

        @pl.when(dj == last)
        def _():
            # Cross-lane reduce + narrow (tile_n,1) store happen once per row tile.
            out_ref[...] = jnp.sum(acc_ref[...], axis=1, keepdims=True)

    return kernel


def _row_sums(x, y, params):
    """Per-row sum of BCE-with-logits loss. x, y: (R, D) float arrays. Returns (R,1) f32."""
    R, D = x.shape
    itemsize = max(x.dtype.itemsize, y.dtype.itemsize)
    d_full = pl.cdiv(D, 128) * 128

    # Row tile: whole array if small, else 256 rows. On v7x, if a single row tile would
    # cover all rows (grid axis 0 == 1), split it in two so both TensorCores get a tile
    # on the 'parallel' axis (multiples of 32 keep f32/bf16/int8 sublane tiling legal).
    tile_n = R if R <= 256 else 256
    if params["split_rows_for_cores"] and pl.cdiv(R, tile_n) == 1 and R >= 64:
        half = (R + 1) // 2
        tile_n = ((half + 31) // 32) * 32

    # Lane tile: aim for target_bytes per input block (generation-gated), multiple of
    # 128, capped so the per-step HBM time dominates the ~0.35us step overhead; never
    # larger than the 128-padded row.
    tile_d = params["target_bytes"] // (tile_n * itemsize)
    tile_d = max(512, (tile_d // 128) * 128)
    tile_d = min(tile_d, params["tile_d_cap"], d_full)
    tile_d = max(tile_d, 128)

    grid = (pl.cdiv(R, tile_n), pl.cdiv(D, tile_d))
    needs_mask = (D % tile_d) != 0
    kernel = _make_bce_rowsum_kernel(tile_n, tile_d, D, needs_mask)

    return pl.pallas_call(
        kernel,
        out_shape=jax.ShapeDtypeStruct((R, 1), jnp.float32),
        grid_spec=pltpu.PrefetchScalarGridSpec(
            num_scalar_prefetch=0,
            grid=grid,
            in_specs=[
                pl.BlockSpec((tile_n, tile_d), lambda i, j: (i, j)),
                pl.BlockSpec((tile_n, tile_d), lambda i, j: (i, j)),
            ],
            out_specs=pl.BlockSpec((tile_n, 1), lambda i, j: (i, 0)),
            scratch_shapes=[pltpu.VMEM((tile_n, 128), jnp.float32)],
        ),
        compiler_params=pltpu.CompilerParams(
            # Row axis shards across TensorCores on v7x; D (reduction) axis stays last.
            dimension_semantics=("parallel", "arbitrary"),
            # Worst case: 2 inputs x 2 buffers x <=8 MiB (f32, v7x) = 32 MiB + small
            # accumulator/output; all generation limits leave headroom under physical VMEM.
            vmem_limit_bytes=params["vmem_limit"],
        ),
    )(x, y)


def bce_with_logits_loss(logits, labels, reduction="mean"):
    """Matches graphs/losses/bce.py::BCEWithLogitsLoss.forward (logits/labels NCHW)."""
    if reduction not in ("mean", "sum", "none"):
        raise ValueError("Unknown reduction parameter : {}".format(reduction))

    params = _gen_params(_tpu_generation())

    N = logits.shape[0]
    D = int(math.prod(logits.shape[1:]))

    x = logits.reshape(N, D)
    y = labels.reshape(N, D)
    # Keep native float dtypes (bf16/f16/f32 read directly; cast to f32 happens in-kernel,
    # exactly matching the module's .float()). Only non-float inputs are cast here.
    if not jnp.issubdtype(x.dtype, jnp.floating):
        x = x.astype(jnp.float32)
    if not jnp.issubdtype(y.dtype, jnp.floating):
        y = y.astype(jnp.float32)

    # Fold each row into several sublane rows (free reshape of a contiguous array) so small
    # batches still fill vregs and DMA blocks; on v7x fold further (target >=512 rows with
    # >=1024 columns each) so both TensorCores get row tiles. Row sums are regrouped below.
    split = 1
    while (N * split < params["fold_rows"]
           and D % (split * 2) == 0
           and D // (split * 2) >= params["min_dp"]):
        split *= 2
    R, Dp = N * split, D // split
    xr = x.reshape(R, Dp)
    yr = y.reshape(R, Dp)

    row_sums = _row_sums(xr, yr, params)                        # (R, 1) f32
    per_sample = jnp.sum(row_sums.reshape(N, split), axis=1)    # (N,)

    if reduction == "mean":
        return jnp.sum(per_sample) / jnp.float32(N * D)
    elif reduction == "sum":
        return jnp.sum(per_sample)
    else:  # 'none' -> per-sample mean over (C, H, W), shape (N,)
        return per_sample / jnp.float32(D)


def _reference(logits, labels, reduction):
    x = logits.astype(jnp.float32)
    y = labels.astype(jnp.float32)
    loss = jnp.maximum(x, 0.0) - x * y + jnp.log1p(jnp.exp(-jnp.abs(x)))
    if reduction == "mean":
        return jnp.mean(loss)
    elif reduction == "sum":
        return jnp.sum(loss)
    else:  # module's 'none': mean over (C, H, W)
        return jnp.mean(loss, axis=(1, 2, 3))


if __name__ == "__main__":
    key = jax.random.PRNGKey(0)
    k1, k2 = jax.random.split(key)
    N, C, H, W = 2, 4, 16, 16
    logits = jax.random.normal(k1, (N, C, H, W), dtype=jnp.float32) * 2.0
    labels = (jax.random.uniform(k2, (N, C, H, W)) > 0.5).astype(jnp.float32)

    ok = True
    for reduction in ("mean", "sum", "none"):
        out = bce_with_logits_loss(logits, labels, reduction=reduction)
        out = jax.block_until_ready(out)
        ref = _reference(logits, labels, reduction)
        if not jnp.allclose(out, ref, rtol=1e-5, atol=1e-5):
            ok = False
            print(f"MISMATCH for reduction={reduction}: {out} vs {ref}")

    # Also exercise a bf16, non-128-multiple-D path (last-block-only remainder masking).
    k3, k4 = jax.random.split(k1)
    logits2 = jax.random.normal(k3, (2, 3, 10, 10), dtype=jnp.bfloat16)
    labels2 = (jax.random.uniform(k4, (2, 3, 10, 10)) > 0.5).astype(jnp.bfloat16)
    out2 = jax.block_until_ready(bce_with_logits_loss(logits2, labels2, "mean"))
    ref2 = _reference(logits2, labels2, "mean")
    if not jnp.allclose(out2, ref2, rtol=2e-2, atol=2e-2):
        ok = False
        print(f"MISMATCH (bf16, ragged D): {out2} vs {ref2}")

    if ok:
        print("KERNEL_OK")
</pallas_src>

<mosaic_0001>
module attributes {stable_mosaic.version = 11 : i64} {
  func.func @kernel(%arg0: i32, %arg1: i32, %arg2: memref<8x256xf32, #tpu.memory_space<vmem>>, %arg3: memref<8x256xf32, #tpu.memory_space<vmem>>, %arg4: memref<8x1xf32, #tpu.memory_space<vmem>>, %arg5: memref<8x128xf32, #tpu.memory_space<vmem>>) attributes {dimension_semantics = [#tpu.dimension_semantics<parallel>, #tpu.dimension_semantics<arbitrary>], iteration_bounds = array<i64: 1, 1>, scalar_prefetch = 0 : i64, scratch_operands = 1 : i64, tpu.core_type = #tpu.core_type<tc>, window_params = [{transform_indices = @transform_0, window_bounds = array<i64: 8, 256>}, {transform_indices = @transform_1, window_bounds = array<i64: 8, 256>}, {transform_indices = @transform_2, window_bounds = array<i64: 8, 1>}]} {
    %c0_i32 = arith.constant 0 : i32
    %0 = arith.cmpi eq, %arg1, %c0_i32 : i32
    %1 = arith.extui %0 : i1 to i32
    %c0_i32_0 = arith.constant 0 : i32
    %2 = arith.cmpi ne, %1, %c0_i32_0 : i32
    scf.if %2 {
      %cst_20 = arith.constant 0.000000e+00 : f32
      %36 = vector.broadcast %cst_20 : f32 to vector<8x128xf32>
      %c0_21 = arith.constant 0 : index
      %c0_22 = arith.constant 0 : index
      %37 = vector.load %arg5[%c0_21, %c0_22] : memref<8x128xf32, #tpu.memory_space<vmem>>, vector<8x128xf32>
      tpu.vector_store %arg5[%c0_21, %c0_22], %36 {strides = array<i32>} : memref<8x128xf32, #tpu.memory_space<vmem>>, vector<8x128xf32>,
    } else {
    }
    %c0 = arith.constant 0 : index
    %c0_1 = arith.constant 0 : index
    %3 = vector.load %arg5[%c0, %c0_1] : memref<8x128xf32, #tpu.memory_space<vmem>>, vector<8x128xf32>
    %c0_2 = arith.constant 0 : index
    %c0_3 = arith.constant 0 : index
    %4 = vector.load %arg2[%c0_2, %c0_3] : memref<8x256xf32, #tpu.memory_space<vmem>>, vector<8x128xf32>
    %c0_4 = arith.constant 0 : index
    %c0_5 = arith.constant 0 : index
    %5 = vector.load %arg3[%c0_4, %c0_5] : memref<8x256xf32, #tpu.memory_space<vmem>>, vector<8x128xf32>
    %cst = arith.constant 0.000000e+00 : f32
    %6 = vector.broadcast %cst : f32 to vector<8x128xf32>
    %7 = arith.maximumf %4, %6 : vector<8x128xf32>
    %8 = arith.mulf %4, %5 : vector<8x128xf32>
    %9 = arith.subf %7, %8 : vector<8x128xf32>
    %10 = math.absf %4 : vector<8x128xf32>
    %cst_6 = arith.constant 0.000000e+00 : f32
    %11 = vector.broadcast %cst_6 : f32 to vector<8x128xf32>
    %12 = arith.subf %11, %10 : vector<8x128xf32>
    %13 = math.exp %12 : vector<8x128xf32>
    %14 = math.log1p %13 : vector<8x128xf32>
    %15 = arith.addf %9, %14 : vector<8x128xf32>
    %16 = arith.addf %3, %15 : vector<8x128xf32>
    %c0_7 = arith.constant 0 : index
    %c0_8 = arith.constant 0 : index
    %17 = vector.load %arg5[%c0_7, %c0_8] : memref<8x128xf32, #tpu.memory_space<vmem>>, vector<8x128xf32>
    tpu.vector_store %arg5[%c0_7, %c0_8], %16 {strides = array<i32>} : memref<8x128xf32, #tpu.memory_space<vmem>>, vector<8x128xf32>,
    %c0_9 = arith.constant 0 : index
    %c0_10 = arith.constant 0 : index
    %18 = vector.load %arg5[%c0_9, %c0_10] : memref<8x128xf32, #tpu.memory_space<vmem>>, vector<8x128xf32>
    %c0_11 = arith.constant 0 : index
    %c128 = arith.constant 128 : index
    %19 = vector.load %arg2[%c0_11, %c128] : memref<8x256xf32, #tpu.memory_space<vmem>>, vector<8x128xf32>
    %c0_12 = arith.constant 0 : index
    %c128_13 = arith.constant 128 : index
    %20 = vector.load %arg3[%c0_12, %c128_13] : memref<8x256xf32, #tpu.memory_space<vmem>>, vector<8x128xf32>
    %cst_14 = arith.constant 0.000000e+00 : f32
    %21 = vector.broadcast %cst_14 : f32 to vector<8x128xf32>
    %22 = arith.maximumf %19, %21 : vector<8x128xf32>
    %23 = arith.mulf %19, %20 : vector<8x128xf32>
    %24 = arith.subf %22, %23 : vector<8x128xf32>
    %25 = math.absf %19 : vector<8x128xf32>
    %cst_15 = arith.constant 0.000000e+00 : f32
    %26 = vector.broadcast %cst_15 : f32 to vector<8x128xf32>
    %27 = arith.subf %26, %25 : vector<8x128xf32>
    %28 = math.exp %27 : vector<8x128xf32>
    %29 = math.log1p %28 : vector<8x128xf32>
    %30 = arith.addf %24, %29 : vector<8x128xf32>
    %31 = arith.addf %18, %30 : vector<8x128xf32>
    %c0_16 = arith.constant 0 : index
    %c0_17 = arith.constant 0 : index
    %32 = vector.load %arg5[%c0_16, %c0_17] : memref<8x128xf32, #tpu.memory_space<vmem>>, vector<8x128xf32>
    tpu.vector_store %arg5[%c0_16, %c0_17], %31 {strides = array<i32>} : memref<8x128xf32, #tpu.memory_space<vmem>>, vector<8x128xf32>,
    %c0_i32_18 = arith.constant 0 : i32
    %33 = arith.cmpi eq, %arg1, %c0_i32_18 : i32
    %34 = arith.extui %33 : i1 to i32
    %c0_i32_19 = arith.constant 0 : i32
    %35 = arith.cmpi ne, %34, %c0_i32_19 : i32
    scf.if %35 {
      %c0_20 = arith.constant 0 : index
      %c0_21 = arith.constant 0 : index
      %36 = vector.load %arg5[%c0_20, %c0_21] : memref<8x128xf32, #tpu.memory_space<vmem>>, vector<8x128xf32>
      %cst_22 = arith.constant dense<0.000000e+00> : vector<8xf32>
      %37 = vector.multi_reduction <add>, %36, %cst_22 [1] : vector<8x128xf32> to vector<8xf32>
      %38 = vector.shape_cast %37 : vector<8xf32> to vector<8x1xf32>
      %c0_23 = arith.constant 0 : index
      %c0_24 = arith.constant 0 : index
      %39 = vector.load %arg4[%c0_23, %c0_24] : memref<8x1xf32, #tpu.memory_space<vmem>>, vector<8x1xf32>
      tpu.vector_store %arg4[%c0_23, %c0_24], %38 {strides = array<i32>} : memref<8x1xf32, #tpu.memory_space<vmem>>, vector<8x1xf32>,
    } else {
    }
    return
  }
  func.func @transform_0(%arg0: i32, %arg1: i32) -> (i32, i32) {
    %c0_i32 = arith.constant 0 : i32
    return %arg0, %arg1 : i32, i32
  }
  func.func @transform_1(%arg0: i32, %arg1: i32) -> (i32, i32) {
    %c0_i32 = arith.constant 0 : i32
    return %arg0, %arg1 : i32, i32
  }
  func.func @transform_2(%arg0: i32, %arg1: i32) -> (i32, i32) {
    %c0_i32 = arith.constant 0 : i32
    %c0_i32_0 = arith.constant 0 : i32
    return %arg0, %c0_i32 : i32, i32
  }
}

</mosaic_0001>

<llo_original>
// kernel: tpu_custom_call.1
$region0: #{tpu_custom_call.1}
  #allocation0 [shape = 'u32[]', space=smem, size = 0x4, offset = 0x4, fixed_abs, tag = 'smem constant byte address 0x4 - core index']
  #allocation1 [shape = 'u32[72,128]{1,0:T(1,128)}', space=vmem, size = 0x9000, scoped, tag = 'internal scratch']
  #allocation2 [shape = 'f32[8,128]{1,0:T(8,128)}', space=vmem, size = 0x1000, scoped, tag = 'scratch operand']
  %s0 = inlined_call_operand.hbm [shape: f32[8,256], index: 0, kind: input, shape index: {}]
  %s1 = inlined_call_operand.hbm [shape: f32[8,256], index: 1, kind: input, shape index: {}]
  %s2 = inlined_call_operand.vmem [shape: f32[8,1], index: 2, kind: output, shape index: {}]
  %s3 = sld [smem:[#allocation0]]
  $region34: #{tpu_custom_call.1} parent=0
    _
  %s5 = ssub.s32 1, %s3
  %s6 = scalar_select 0, %s5, %s3
  $region1: #{tpu_custom_call.1} parent=0
    #allocation3 [shape = 'u8[8192]{0}', space=vmem, size = 0x2000, scoped, tag = 'input window, operand 0, single buffered']
    #allocation4 [shape = 's32[1]{0}', space=sflag, size = 0x4, scoped, tag = 'scoped memory for tpu_custom_call.1']
    #allocation5 [shape = 'u8[8192]{0}', space=vmem, size = 0x2000, scoped, tag = 'input window, operand 1, single buffered']
    #allocation6 [shape = 's32[1]{0}', space=sflag, size = 0x4, scoped, tag = 'scoped memory for tpu_custom_call.1']
    %7 = vsyncpa [#allocation4], 0
    %8 = vsyncpa [#allocation6], 0
    // Predicated region
    $region2: #{tpu_custom_call.1} parent=1 // pred_check
      _
    $region3: #{tpu_custom_call.1} parent=1 // pred_check_branch
      %10 = sbr.rel (0) target = $region5
    $region4: #{tpu_custom_call.1} parent=1 // pred_region
      %12 = vsyncadd [#allocation4], 0
      %s14 = sshll.u32 %s0, 4
      %s15 = int_to_ptr.hbm [resolvable:$true] %s14
      %s16 = sshll.u32 [#allocation3], 4
      %s17 = int_to_ptr.vmem [resolvable:$true] %s16
      %19 = dma.hbm_to_vmem [thread:$0]  %s15, 256, %s17, [#allocation4]
    $region5: #{tpu_custom_call.1} parent=1 // pred_fallthru
      _
    // Predicated region
    $region6: #{tpu_custom_call.1} parent=1 // pred_check
      _
    $region7: #{tpu_custom_call.1} parent=1 // pred_check_branch
      %21 = sbr.rel (0) target = $region9
    $region8: #{tpu_custom_call.1} parent=1 // pred_region
      %23 = vsyncadd [#allocation6], 0
      %s25 = sshll.u32 %s1, 4
      %s26 = int_to_ptr.hbm [resolvable:$true] %s25
      %s27 = sshll.u32 [#allocation5], 4
      %s28 = int_to_ptr.vmem [resolvable:$true] %s27
      %30 = dma.hbm_to_vmem [thread:$0]  %s26, 256, %s28, [#allocation6]
    $region9: #{tpu_custom_call.1} parent=1 // pred_fallthru
      _
    // Predicated region
    $region10: #{tpu_custom_call.1} parent=1 // pred_check
      _
    $region11: #{tpu_custom_call.1} parent=1 // pred_check_branch
      %32 = sbr.rel (0) target = $region13
    $region12: #{tpu_custom_call.1} parent=1 // pred_region
      %34 = dma.done [#allocation4], 256
    $region13: #{tpu_custom_call.1} parent=1 // pred_fallthru
      _
    // Predicated region
    $region14: #{tpu_custom_call.1} parent=1 // pred_check
      _
    $region15: #{tpu_custom_call.1} parent=1 // pred_check_branch
      %36 = sbr.rel (0) target = $region17
    $region16: #{tpu_custom_call.1} parent=1 // pred_region
      %38 = dma.done [#allocation6], 256
    $region17: #{tpu_custom_call.1} parent=1 // pred_fallthru
      _
    %p39 = scmp.eq.s32.totalorder 0, 0
    // Predicated region
    $region18: #{tpu_custom_call.1} parent=1 // pred_check
      %p40 = pneg %p39
    $region19: #{tpu_custom_call.1} parent=1 // pred_check_branch
      %42 = sbr.rel (%p40) target = $region21
    $region20: #{tpu_custom_call.1} parent=1 // pred_region
      %43 = vst [vmem:[#allocation2] sm:$0xff] 0.0
    $region21: #{tpu_custom_call.1} parent=1 // pred_fallthru
      _
    %v44 = vld [vmem:[#allocation2] sm:$0xff]
    %v45 = vld [vmem:[#allocation3] sm:$0xff]
    %v46 = vld [vmem:[#allocation5] sm:$0xff]
    %v47 = vmax.f32 %v45, 0.0
    %v48 = vmul.f32 %v45, %v46
    %v49 = vsub.f32 %v47, %v48
    %v50 = vand.u32 2147483647, %v45
    %v51 = vsub.f32 0.0, %v50
    %v52 = vmul.f32 %v51, 1.442695
    %v53 = vpow.pop %v52
    %v54 = vadd.f32 %v53, 1.0
    %v55 = vlog2.pop %v54
    %v56 = vmul.f32 %v55, 0.6931472
    %v57 = vmul.f32 -0.5, %v53
    %v58 = vadd.f32 %v57, 1.0
    %v59 = vmul.f32 %v58, %v53
    %v60 = vand.u32 2147483647, %v53
    %vm61 = vcmp.lt.f32.partialorder %v60, 0.0004427343
    %v62 = vsel %vm61, %v59, %v56
    %v63 = vadd.f32 %v49, %v62
    %v64 = vadd.f32 %v44, %v63
    %65 = vst [vmem:[#allocation2] sm:$0xff] %v64
    %v66 = vld [vmem:[#allocation2] sm:$0xff]
    %v67 = vld [vmem:[#allocation3 + $0x8] sm:$0xff]
    %v68 = vld [vmem:[#allocation5 + $0x8] sm:$0xff]
    %v69 = vmax.f32 %v67, 0.0
    %v70 = vmul.f32 %v67, %v68
    %v71 = vsub.f32 %v69, %v70
    %v72 = vand.u32 2147483647, %v67
    %v73 = vsub.f32 0.0, %v72
    %v74 = vmul.f32 %v73, 1.442695
    %v75 = vpow.pop %v74
    %v76 = vadd.f32 %v75, 1.0
    %v77 = vlog2.pop %v76
    %v78 = vmul.f32 %v77, 0.6931472
    %v79 = vmul.f32 -0.5, %v75
    %v80 = vadd.f32 %v79, 1.0
    %v81 = vmul.f32 %v80, %v75
    %v82 = vand.u32 2147483647, %v75
    %vm83 = vcmp.lt.f32.partialorder %v82, 0.0004427343
    %v84 = vsel %vm83, %v81, %v78
    %v85 = vadd.f32 %v71, %v84
    %v86 = vadd.f32 %v66, %v85
    %87 = vst [vmem:[#allocation2] sm:$0xff] %v86
    // Predicated region
    $region22: #{tpu_custom_call.1} parent=1 // pred_check
      %p88 = pneg %p39
    $region23: #{tpu_custom_call.1} parent=1 // pred_check_branch
      %90 = sbr.rel (%p88) target = $region25
    $region24: #{tpu_custom_call.1} parent=1 // pred_region
      %v91 = vld [vmem:[#allocation2] sm:$0xff]
      %92 = vadd.xlane.f32.xlu0 %v91
      %v93 = vpop.xlane.xlu0 %92
      %vm94 = vcmask 7168
      %95 = vst.msk [vmem:[%s2] sm:$0xff] %vm94, %v93
    $region25: #{tpu_custom_call.1} parent=1 // pred_fallthru
      _
    // Predicated region
    $region26: #{tpu_custom_call.1} parent=1 // pred_check
      _
    $region27: #{tpu_custom_call.1} parent=1 // pred_check_branch
      %97 = sbr.rel (0) target = $region29
    $region28: #{tpu_custom_call.1} parent=1 // pred_region
      _
    $region29: #{tpu_custom_call.1} parent=1 // pred_fallthru
      _
    // Predicated region
    $region30: #{tpu_custom_call.1} parent=1 // pred_check
      _
    $region31: #{tpu_custom_call.1} parent=1 // pred_check_branch
      %99 = sbr.rel (0) target = $region33
    $region32: #{tpu_custom_call.1} parent=1 // pred_region
      _
    $region33: #{tpu_custom_call.1} parent=1 // pred_fallthru
      _
    %100 = vsyncpa [#allocation4], 1
    %101 = vsyncpa [#allocation6], 1

</llo_original>
